<compile_context>
chip_gen: v6e
topology: v6e:2x2x1
jax: 0.10.0
libtpu: 0.0.40
codegen_flags: <defaults>
</compile_context>

<pallas_src>
import functools

import jax
import jax.numpy as jnp
from jax import lax
from jax.experimental import pallas as pl
from jax.experimental.pallas import tpu as pltpu

PADDING_IDX = 2


def _round_up(x, m):
    return ((x + m - 1) // m) * m


def _sublane_multiple(itemsize):
    # f32/int32 -> 8, bf16/f16 -> 16, int8/fp8 -> 32
    if itemsize >= 4:
        return 8
    if itemsize == 2:
        return 16
    return 32


def _vmem_plan():
    """Generation-aware VMEM sizing: (vmem_limit_bytes, working_budget_bytes)."""
    try:
        cap = int(pltpu.get_tpu_info().vmem_capacity_bytes)
    except Exception:
        cap = 64 << 20  # conservative (v7x per-TC VMEM)
    # v7x (64 MiB)  -> limit 40 MiB ; v5e/v6e (128 MiB) -> limit 96 MiB
    vmem_limit = min(max(cap - (24 << 20), 16 << 20), 96 << 20)
    # working budget (input double-buffer + in-kernel temporaries), with headroom
    budget = min(int(vmem_limit * 0.6), 48 << 20)
    return vmem_limit, budget


def _plan_tiles(n_rows, vocab, itemsize, budget_bytes, *, max_rows=2048, v_chunk_cap=4096):
    """Pick (row_tile, v_chunk) so that double-buffered input + chunk temps fit."""
    mult = _sublane_multiple(itemsize)
    # per-element footprint: 2x input (double buffer) + i32 iota + f32 reduce +
    # a couple of chunk-sized elementwise temps in the input dtype.
    bytes_per_elem = 4 * itemsize + 8
    max_elems = max(budget_bytes // bytes_per_elem, mult * 128)

    min_rows_wanted = min(max_rows, max(mult, 64))
    if vocab <= max(128, max_elems // min_rows_wanted):
        v_chunk = vocab                       # whole vocab per step (no online rescale)
    else:
        v_chunk = (max_elems // min_rows_wanted) // 128 * 128
        v_chunk = max(128, min(v_chunk, v_chunk_cap))

    row_tile = max_elems // v_chunk
    row_tile = max((row_tile // mult) * mult, mult)
    row_tile = min(row_tile, max_rows, _round_up(n_rows, mult))
    row_tile = max(row_tile, mult)
    return row_tile, v_chunk


def _translation_loss_kernel(x_ref, t_ref, o_ref, m_scr, s_scr, g_scr, *,
                             vocab, need_col_mask):
    j = pl.program_id(1)
    nj = pl.num_programs(1)
    row_tile, v_chunk = x_ref.shape
    dt = x_ref.dtype

    @pl.when(j == 0)
    def _():
        m_scr[...] = jnp.full(m_scr.shape, -jnp.inf, m_scr.dtype)
        s_scr[...] = jnp.zeros(s_scr.shape, s_scr.dtype)
        g_scr[...] = jnp.zeros(g_scr.shape, g_scr.dtype)

    t = t_ref[...]                                   # (row_tile, 1) int32
    xc = x_ref[...]                                  # (row_tile, v_chunk), native dtype
    col = lax.broadcasted_iota(jnp.int32, (row_tile, v_chunk), 1) + j * v_chunk

    if need_col_mask:
        # only emitted when v_chunk does not divide V: mask out-of-vocab lanes
        xm = jnp.where(col < vocab, xc, -jnp.inf)
    else:
        xm = xc

    # online max / sum-exp (elementwise in input dtype, accumulation in f32)
    m_old = m_scr[...]
    m_new = jnp.maximum(m_old, jnp.max(xm, axis=-1, keepdims=True).astype(jnp.float32))
    e = jnp.exp(xm - m_new.astype(dt))
    s_scr[...] = s_scr[...] * jnp.exp(m_old - m_new) + \
        jnp.sum(e.astype(jnp.float32), axis=-1, keepdims=True)
    m_scr[...] = m_new

    # gather x[i, target[i]] (exact: the selected value is a raw input element)
    sel = jnp.where(col == t, xc, 0)
    g_scr[...] = g_scr[...] + jnp.sum(sel, axis=-1, keepdims=True).astype(jnp.float32)

    @pl.when(j == nj - 1)
    def _():
        row_nll = (m_scr[...] + jnp.log(s_scr[...])) - g_scr[...]
        # zero padding rows (also kills NaN/garbage from out-of-bounds tail rows)
        o_ref[...] = jnp.where(t != PADDING_IDX, row_nll, 0.0)


def translation_loss(x, target, *, row_tile=None, v_chunk=None):
    """x: (N, V) float logits (f32 or bf16), target: (N,) ints. Returns scalar loss."""
    N, V = x.shape
    itemsize = jnp.dtype(x.dtype).itemsize
    mult = _sublane_multiple(itemsize)

    vmem_limit, budget = _vmem_plan()
    auto_rt, auto_vc = _plan_tiles(N, V, itemsize, budget)

    if row_tile is None:
        row_tile = auto_rt
    else:
        row_tile = max(_round_up(int(row_tile), mult), mult)
    if v_chunk is None:
        v_chunk = auto_vc
    else:
        v_chunk = min(int(v_chunk), V)
        if v_chunk < V:
            v_chunk = max(_round_up(v_chunk, 128), 128)

    num_row_tiles = pl.cdiv(N, row_tile)
    num_v_chunks = pl.cdiv(V, v_chunk)
    padded_rows = num_row_tiles * row_tile
    need_col_mask = (V % v_chunk) != 0

    # Pad ONLY the (tiny) target vector; logits are never rewritten in HBM.
    t2d = target.astype(jnp.int32).reshape(N, 1)
    if padded_rows != N:
        t2d = jnp.pad(t2d, ((0, padded_rows - N), (0, 0)),
                      constant_values=PADDING_IDX)

    kernel = functools.partial(_translation_loss_kernel,
                               vocab=V, need_col_mask=need_col_mask)

    per_row = pl.pallas_call(
        kernel,
        out_shape=jax.ShapeDtypeStruct((padded_rows, 1), jnp.float32),
        grid_spec=pltpu.PrefetchScalarGridSpec(
            num_scalar_prefetch=0,
            grid=(num_row_tiles, num_v_chunks),
            in_specs=[
                pl.BlockSpec((row_tile, v_chunk), lambda i, j: (i, j)),
                pl.BlockSpec((row_tile, 1), lambda i, j: (i, 0)),
            ],
            out_specs=pl.BlockSpec((row_tile, 1), lambda i, j: (i, 0)),
            scratch_shapes=[
                pltpu.VMEM((row_tile, 1), jnp.float32),   # running max
                pltpu.VMEM((row_tile, 1), jnp.float32),   # running sum(exp)
                pltpu.VMEM((row_tile, 1), jnp.float32),   # gathered logit x[i, t[i]]
            ],
        ),
        compiler_params=pltpu.CompilerParams(
            # row tiles are independent -> shard across TensorCores on v7x;
            # vocab chunks carry the online accumulator -> arbitrary.
            dimension_semantics=("parallel", "arbitrary"),
            vmem_limit_bytes=vmem_limit,
        ),
    )(x, t2d)

    # TODO(synk): targets outside [0, V) other than PADDING_IDX contribute m+lse
    # (torch's scatter_ would error); assumed not to occur upstream.
    return jnp.sum(per_row)


def _reference_loss(x, target):
    # pure-JAX reference mirroring the PyTorch semantics
    logp = jax.nn.log_softmax(x.astype(jnp.float32), axis=-1)
    onehot = jax.nn.one_hot(target, x.shape[-1], dtype=jnp.float32)
    valid = (target != PADDING_IDX).astype(jnp.float32)[:, None]
    return jnp.sum(onehot * valid * (-logp))


if __name__ == "__main__":
    key = jax.random.PRNGKey(0)
    k1, k2, k3, k4, k5, k6, k7, k8 = jax.random.split(key, 8)

    # 1) small f32 case consistent with the module: 8 tokens, vocab 32
    N, V = 8, 32
    x = jax.random.normal(k1, (N, V), dtype=jnp.float32)
    target = jax.random.randint(k2, (N,), 0, V, dtype=jnp.int32)
    target = target.at[3].set(PADDING_IDX)          # exercise the mask path
    loss = translation_loss(x, target)
    jax.block_until_ready(loss)
    ref = _reference_loss(x, target)
    assert jnp.allclose(loss, ref, rtol=1e-5, atol=1e-4), (loss, ref)

    # 2) bf16 logits, multi row-tile grid with a row tail (no padding of x)
    N2, V2 = 40, 128
    x2 = jax.random.normal(k3, (N2, V2)).astype(jnp.bfloat16)
    t2 = jax.random.randint(k4, (N2,), 0, V2, dtype=jnp.int32)
    t2 = t2.at[0].set(PADDING_IDX)
    loss2 = translation_loss(x2, t2, row_tile=16)   # 3 row tiles, tail rows masked
    jax.block_until_ready(loss2)
    ref2 = _reference_loss(x2, t2)
    assert jnp.allclose(loss2, ref2, rtol=1e-2, atol=1e-2), (loss2, ref2)

    # 3) f32, vocab chunked over the second grid axis (online LSE) + row tail
    N3, V3 = 48, 2048
    x3 = jax.random.normal(k5, (N3, V3), dtype=jnp.float32)
    t3 = jax.random.randint(k6, (N3,), 0, V3, dtype=jnp.int32)
    t3 = t3.at[7].set(PADDING_IDX)
    loss3 = translation_loss(x3, t3, row_tile=32, v_chunk=512)
    jax.block_until_ready(loss3)
    ref3 = _reference_loss(x3, t3)
    assert jnp.allclose(loss3, ref3, rtol=1e-5, atol=1e-3), (loss3, ref3)

    # 4) vocab not a multiple of the chunk -> exercises the column-mask path
    N4, V4 = 24, 300
    x4 = jax.random.normal(k7, (N4, V4), dtype=jnp.float32)
    t4 = jax.random.randint(k8, (N4,), 0, V4, dtype=jnp.int32)
    t4 = t4.at[5].set(PADDING_IDX)
    loss4 = translation_loss(x4, t4, row_tile=8, v_chunk=128)
    jax.block_until_ready(loss4)
    ref4 = _reference_loss(x4, t4)
    assert jnp.allclose(loss4, ref4, rtol=1e-5, atol=1e-3), (loss4, ref4)

    print("KERNEL_OK")
</pallas_src>

<mosaic_0001>
module attributes {stable_mosaic.version = 11 : i64} {
  func.func @_translation_loss_kernel(%arg0: i32, %arg1: i32, %arg2: memref<8x32xf32, #tpu.memory_space<vmem>>, %arg3: memref<8x1xi32, #tpu.memory_space<vmem>>, %arg4: memref<8x1xf32, #tpu.memory_space<vmem>>, %arg5: memref<8x1xf32, #tpu.memory_space<vmem>>, %arg6: memref<8x1xf32, #tpu.memory_space<vmem>>, %arg7: memref<8x1xf32, #tpu.memory_space<vmem>>) attributes {dimension_semantics = [#tpu.dimension_semantics<parallel>, #tpu.dimension_semantics<arbitrary>], iteration_bounds = array<i64: 1, 1>, scalar_prefetch = 0 : i64, scratch_operands = 3 : i64, tpu.core_type = #tpu.core_type<tc>, window_params = [{transform_indices = @transform_0, window_bounds = array<i64: 8, 32>}, {transform_indices = @transform_1, window_bounds = array<i64: 8, 1>}, {transform_indices = @transform_2, window_bounds = array<i64: 8, 1>}]} {
    %c0_i32 = arith.constant 0 : i32
    %0 = arith.cmpi eq, %arg1, %c0_i32 : i32
    %1 = arith.extui %0 : i1 to i32
    %c0_i32_0 = arith.constant 0 : i32
    %2 = arith.cmpi ne, %1, %c0_i32_0 : i32
    scf.if %2 {
      %cst_21 = arith.constant 0xFF800000 : f32
      %38 = vector.broadcast %cst_21 : f32 to vector<8x1xf32>
      %c0_22 = arith.constant 0 : index
      %c0_23 = arith.constant 0 : index
      %39 = vector.load %arg5[%c0_22, %c0_23] : memref<8x1xf32, #tpu.memory_space<vmem>>, vector<8x1xf32>
      tpu.vector_store %arg5[%c0_22, %c0_23], %38 {strides = array<i32>} : memref<8x1xf32, #tpu.memory_space<vmem>>, vector<8x1xf32>,
      %cst_24 = arith.constant 0.000000e+00 : f32
      %40 = vector.broadcast %cst_24 : f32 to vector<8x1xf32>
      %c0_25 = arith.constant 0 : index
      %c0_26 = arith.constant 0 : index
      %41 = vector.load %arg6[%c0_25, %c0_26] : memref<8x1xf32, #tpu.memory_space<vmem>>, vector<8x1xf32>
      tpu.vector_store %arg6[%c0_25, %c0_26], %40 {strides = array<i32>} : memref<8x1xf32, #tpu.memory_space<vmem>>, vector<8x1xf32>,
      %cst_27 = arith.constant 0.000000e+00 : f32
      %42 = vector.broadcast %cst_27 : f32 to vector<8x1xf32>
      %c0_28 = arith.constant 0 : index
      %c0_29 = arith.constant 0 : index
      %43 = vector.load %arg7[%c0_28, %c0_29] : memref<8x1xf32, #tpu.memory_space<vmem>>, vector<8x1xf32>
      tpu.vector_store %arg7[%c0_28, %c0_29], %42 {strides = array<i32>} : memref<8x1xf32, #tpu.memory_space<vmem>>, vector<8x1xf32>,
    } else {
    }
    %c0 = arith.constant 0 : index
    %c0_1 = arith.constant 0 : index
    %3 = vector.load %arg3[%c0, %c0_1] : memref<8x1xi32, #tpu.memory_space<vmem>>, vector<8x1xi32>
    %c0_2 = arith.constant 0 : index
    %c0_3 = arith.constant 0 : index
    %4 = vector.load %arg2[%c0_2, %c0_3] : memref<8x32xf32, #tpu.memory_space<vmem>>, vector<8x32xf32>
    %5 = tpu.iota {dimensions = array<i32: 1>} : vector<8x32xi32>
    %c32_i32 = arith.constant 32 : i32
    %6 = arith.muli %arg1, %c32_i32 : i32
    %7 = vector.broadcast %6 : i32 to vector<8x32xi32>
    %8 = arith.addi %5, %7 : vector<8x32xi32>
    %c0_4 = arith.constant 0 : index
    %c0_5 = arith.constant 0 : index
    %9 = vector.load %arg5[%c0_4, %c0_5] : memref<8x1xf32, #tpu.memory_space<vmem>>, vector<8x1xf32>
    %cst = arith.constant dense<0xFF800000> : vector<8xf32>
    %10 = vector.multi_reduction <maximumf>, %4, %cst [1] : vector<8x32xf32> to vector<8xf32>
    %11 = vector.shape_cast %10 : vector<8xf32> to vector<8x1xf32>
    %12 = arith.maximumf %9, %11 : vector<8x1xf32>
    %13 = vector.broadcast %12 : vector<8x1xf32> to vector<8x32xf32>
    %14 = arith.subf %4, %13 : vector<8x32xf32>
    %15 = math.exp %14 : vector<8x32xf32>
    %c0_6 = arith.constant 0 : index
    %c0_7 = arith.constant 0 : index
    %16 = vector.load %arg6[%c0_6, %c0_7] : memref<8x1xf32, #tpu.memory_space<vmem>>, vector<8x1xf32>
    %17 = arith.subf %9, %12 : vector<8x1xf32>
    %18 = math.exp %17 : vector<8x1xf32>
    %19 = arith.mulf %16, %18 : vector<8x1xf32>
    %cst_8 = arith.constant dense<0.000000e+00> : vector<8xf32>
    %20 = vector.multi_reduction <add>, %15, %cst_8 [1] : vector<8x32xf32> to vector<8xf32>
    %21 = vector.shape_cast %20 : vector<8xf32> to vector<8x1xf32>
    %22 = arith.addf %19, %21 : vector<8x1xf32>
    %c0_9 = arith.constant 0 : index
    %c0_10 = arith.constant 0 : index
    %23 = vector.load %arg6[%c0_9, %c0_10] : memref<8x1xf32, #tpu.memory_space<vmem>>, vector<8x1xf32>
    tpu.vector_store %arg6[%c0_9, %c0_10], %22 {strides = array<i32>} : memref<8x1xf32, #tpu.memory_space<vmem>>, vector<8x1xf32>,
    %c0_11 = arith.constant 0 : index
    %c0_12 = arith.constant 0 : index
    %24 = vector.load %arg5[%c0_11, %c0_12] : memref<8x1xf32, #tpu.memory_space<vmem>>, vector<8x1xf32>
    tpu.vector_store %arg5[%c0_11, %c0_12], %12 {strides = array<i32>} : memref<8x1xf32, #tpu.memory_space<vmem>>, vector<8x1xf32>,
    %25 = vector.broadcast %3 : vector<8x1xi32> to vector<8x32xi32>
    %26 = arith.cmpi eq, %8, %25 : vector<8x32xi32>
    %c0_i32_13 = arith.constant 0 : i32
    %27 = arith.sitofp %c0_i32_13 : i32 to f32
    %28 = vector.broadcast %27 : f32 to vector<8x32xf32>
    %29 = arith.select %26, %4, %28 : vector<8x32xi1>, vector<8x32xf32>
    %c0_14 = arith.constant 0 : index
    %c0_15 = arith.constant 0 : index
    %30 = vector.load %arg7[%c0_14, %c0_15] : memref<8x1xf32, #tpu.memory_space<vmem>>, vector<8x1xf32>
    %cst_16 = arith.constant dense<0.000000e+00> : vector<8xf32>
    %31 = vector.multi_reduction <add>, %29, %cst_16 [1] : vector<8x32xf32> to vector<8xf32>
    %32 = vector.shape_cast %31 : vector<8xf32> to vector<8x1xf32>
    %33 = arith.addf %30, %32 : vector<8x1xf32>
    %c0_17 = arith.constant 0 : index
    %c0_18 = arith.constant 0 : index
    %34 = vector.load %arg7[%c0_17, %c0_18] : memref<8x1xf32, #tpu.memory_space<vmem>>, vector<8x1xf32>
    tpu.vector_store %arg7[%c0_17, %c0_18], %33 {strides = array<i32>} : memref<8x1xf32, #tpu.memory_space<vmem>>, vector<8x1xf32>,
    %c0_i32_19 = arith.constant 0 : i32
    %35 = arith.cmpi eq, %arg1, %c0_i32_19 : i32
    %36 = arith.extui %35 : i1 to i32
    %c0_i32_20 = arith.constant 0 : i32
    %37 = arith.cmpi ne, %36, %c0_i32_20 : i32
    scf.if %37 {
      %c0_21 = arith.constant 0 : index
      %c0_22 = arith.constant 0 : index
      %38 = vector.load %arg5[%c0_21, %c0_22] : memref<8x1xf32, #tpu.memory_space<vmem>>, vector<8x1xf32>
      %c0_23 = arith.constant 0 : index
      %c0_24 = arith.constant 0 : index
      %39 = vector.load %arg6[%c0_23, %c0_24] : memref<8x1xf32, #tpu.memory_space<vmem>>, vector<8x1xf32>
      %40 = math.log %39 : vector<8x1xf32>
      %41 = arith.addf %38, %40 : vector<8x1xf32>
      %c0_25 = arith.constant 0 : index
      %c0_26 = arith.constant 0 : index
      %42 = vector.load %arg7[%c0_25, %c0_26] : memref<8x1xf32, #tpu.memory_space<vmem>>, vector<8x1xf32>
      %43 = arith.subf %41, %42 : vector<8x1xf32>
      %c2_i32 = arith.constant 2 : i32
      %44 = vector.broadcast %c2_i32 : i32 to vector<8x1xi32>
      %45 = arith.cmpi ne, %3, %44 : vector<8x1xi32>
      %cst_27 = arith.constant 0.000000e+00 : f32
      %46 = vector.broadcast %cst_27 : f32 to vector<8x1xf32>
      %47 = arith.select %45, %43, %46 : vector<8x1xi1>, vector<8x1xf32>
      %c0_28 = arith.constant 0 : index
      %c0_29 = arith.constant 0 : index
      %48 = vector.load %arg4[%c0_28, %c0_29] : memref<8x1xf32, #tpu.memory_space<vmem>>, vector<8x1xf32>
      tpu.vector_store %arg4[%c0_28, %c0_29], %47 {strides = array<i32>} : memref<8x1xf32, #tpu.memory_space<vmem>>, vector<8x1xf32>,
    } else {
    }
    return
  }
  func.func @transform_0(%arg0: i32, %arg1: i32) -> (i32, i32) {
    %c0_i32 = arith.constant 0 : i32
    return %arg0, %arg1 : i32, i32
  }
  func.func @transform_1(%arg0: i32, %arg1: i32) -> (i32, i32) {
    %c0_i32 = arith.constant 0 : i32
    %c0_i32_0 = arith.constant 0 : i32
    return %arg0, %c0_i32 : i32, i32
  }
  func.func @transform_2(%arg0: i32, %arg1: i32) -> (i32, i32) {
    %c0_i32 = arith.constant 0 : i32
    %c0_i32_0 = arith.constant 0 : i32
    return %arg0, %c0_i32 : i32, i32
  }
}

</mosaic_0001>

<llo_original>
// kernel: tpu_custom_call.1
$region0: #{tpu_custom_call.1}
  #allocation0 [shape = 'u32[]', space=smem, size = 0x4, offset = 0x4, fixed_abs, tag = 'smem constant byte address 0x4 - core index']
  #allocation1 [shape = 'u32[144,128]{1,0:T(1,128)}', space=vmem, size = 0x12000, scoped, tag = 'internal scratch']
  #allocation2 [shape = 'f32[8,1]{1,0:T(8,128)}', space=vmem, size = 0x1000, scoped, tag = 'scratch operand']
  #allocation3 [shape = 'f32[8,1]{1,0:T(8,128)}', space=vmem, size = 0x1000, scoped, tag = 'scratch operand']
  #allocation4 [shape = 'f32[8,1]{1,0:T(8,128)}', space=vmem, size = 0x1000, scoped, tag = 'scratch operand']
  %s0 = inlined_call_operand.vmem [shape: f32[8,32], index: 0, kind: input, shape index: {}]
  %s1 = inlined_call_operand.vmem [shape: s32[8,1], index: 1, kind: input, shape index: {}]
  %s2 = inlined_call_operand.vmem [shape: f32[8,1], index: 2, kind: output, shape index: {}]
  %s3 = sld [smem:[#allocation0]]
  $region26: #{tpu_custom_call.1} parent=0
    _
  %s5 = ssub.s32 1, %s3
  %s6 = scalar_select 0, %s5, %s3
  // Predicated region
  $region2: #{tpu_custom_call.1} parent=0 // pred_check
    _
  $region3: #{tpu_custom_call.1} parent=0 // pred_check_branch
    %8 = sbr.rel (0) target = $region5
  $region4: #{tpu_custom_call.1} parent=0 // pred_region
    _
  $region5: #{tpu_custom_call.1} parent=0 // pred_fallthru
    _
  // Predicated region
  $region6: #{tpu_custom_call.1} parent=0 // pred_check
    _
  $region7: #{tpu_custom_call.1} parent=0 // pred_check_branch
    %10 = sbr.rel (0) target = $region9
  $region8: #{tpu_custom_call.1} parent=0 // pred_region
    _
  $region9: #{tpu_custom_call.1} parent=0 // pred_fallthru
    _
  %p11 = scmp.eq.s32.totalorder 0, 0
  // Predicated region
  $region10: #{tpu_custom_call.1} parent=0 // pred_check
    %p12 = pneg %p11
  $region11: #{tpu_custom_call.1} parent=0 // pred_check_branch
    %14 = sbr.rel (%p12) target = $region13
  $region12: #{tpu_custom_call.1} parent=0 // pred_region
    %vm15 = vcmask 7168
    %16 = vst.msk [vmem:[#allocation2] sm:$0xff] %vm15, -inf
    %17 = vst.msk [vmem:[#allocation3] sm:$0xff] %vm15, 0.0
    %18 = vst.msk [vmem:[#allocation4] sm:$0xff] %vm15, 0.0
  $region13: #{tpu_custom_call.1} parent=0 // pred_fallthru
    _
  %v19 = vld [vmem:[%s1] sm:$0xff]
  %v20 = vld [vmem:[%s0] sm:$0xff]
  %v21 = vlaneseq
  %v22 = vand.u32 %v21, 127
  %s23 = smul.u32 0, 32
  %v24 = vstv %s23
  %v25 = vadd.s32 %v22, %v24
  %v26 = vld [vmem:[#allocation2] sm:$0xff]
  %vm27 = vcmask 261120
  %v28 = vsel %vm27, %v20, -inf
  %29 = vmax.xlane.f32.xlu0 %v28
  %v30 = vpop.xlane.xlu0 %29
  %v31 = vmax.f32 %v26, %v30
  %33 = vset.pattern.permute.xlu0 0
  %34 = vperm.xlu0 %33, %v31
  %v35 = vpop.permute.xlu0 %34
  %v37 = vsub.f32 %v20, %v35
  %v38 = vmul.f32 %v37, 1.442695
  %v39 = vpow.pop %v38
  %v40 = vld [vmem:[#allocation3] sm:$0xff]
  %v41 = vsub.f32 %v26, %v31
  %v42 = vmul.f32 %v41, 1.442695
  %v43 = vpow.pop %v42
  %v44 = vmul.f32 %v40, %v43
  %v45 = vsel %vm27, %v39, 0.0
  %46 = vadd.xlane.f32.xlu0 %v45
  %v47 = vpop.xlane.xlu0 %46
  %v48 = vadd.f32 %v44, %v47
  %vm49 = vcmask 7168
  %50 = vst.msk [vmem:[#allocation3] sm:$0xff] %vm49, %v48
  %51 = vst.msk [vmem:[#allocation2] sm:$0xff] %vm49, %v31
  %52 = vset.pattern.permute.xlu0 0
  %53 = vperm.xlu0 %52, %v19
  %v54 = vpop.permute.xlu0 %53
  %vm55 = vcmp.eq.s32.totalorder %v25, %v54
  %v56 = vsel %vm55, %v20, 0.0
  %v57 = vld [vmem:[#allocation4] sm:$0xff]
  %v58 = vsel %vm27, %v56, 0.0
  %59 = vadd.xlane.f32.xlu0 %v58
  %v60 = vpop.xlane.xlu0 %59
  %v61 = vadd.f32 %v57, %v60
  %62 = vst.msk [vmem:[#allocation4] sm:$0xff] %vm49, %v61
  // Predicated region
  $region14: #{tpu_custom_call.1} parent=0 // pred_check
    %p63 = pneg %p11
  $region15: #{tpu_custom_call.1} parent=0 // pred_check_branch
    %65 = sbr.rel (%p63) target = $region17
  $region16: #{tpu_custom_call.1} parent=0 // pred_region
    %v66 = vld [vmem:[#allocation2] sm:$0xff]
    %v67 = vld [vmem:[#allocation3] sm:$0xff]
    %v68 = vlog2.pop %v67
    %v69 = vmul.f32 %v68, 0.6931472
    %v70 = vadd.f32 %v66, %v69
    %v71 = vld [vmem:[#allocation4] sm:$0xff]
    %v72 = vsub.f32 %v70, %v71
    %vm73 = vcmp.ne.s32.totalorder %v19, 2
    %v74 = vsel %vm73, %v72, 0.0
    %75 = vst.msk [vmem:[%s2] sm:$0xff] %vm49, %v74
  $region17: #{tpu_custom_call.1} parent=0 // pred_fallthru
    _
  // Predicated region
  $region18: #{tpu_custom_call.1} parent=0 // pred_check
    _
  $region19: #{tpu_custom_call.1} parent=0 // pred_check_branch
    %77 = sbr.rel (0) target = $region21
  $region20: #{tpu_custom_call.1} parent=0 // pred_region
    _
  $region21: #{tpu_custom_call.1} parent=0 // pred_fallthru
    _
  // Predicated region
  $region22: #{tpu_custom_call.1} parent=0 // pred_check
    _
  $region23: #{tpu_custom_call.1} parent=0 // pred_check_branch
    %79 = sbr.rel (0) target = $region25
  $region24: #{tpu_custom_call.1} parent=0 // pred_region
    _
  $region25: #{tpu_custom_call.1} parent=0 // pred_fallthru
    _

</llo_original>
